<compile_context>
chip_gen: v7x
topology: tpu7x:2x2x1
jax: 0.10.0
libtpu: 0.0.40
codegen_flags: <defaults>
</compile_context>

<pallas_src>
import functools

import jax
import jax.numpy as jnp
from jax.experimental import pallas as pl
from jax.experimental.pallas import tpu as pltpu


# --------------------------------------------------------------------------- #
# helpers
# --------------------------------------------------------------------------- #
def _round_up(x, m):
    return ((x + m - 1) // m) * m


def _pad2(a, rows, cols):
    """Zero-pad a 2-D array up to (rows, cols)."""
    return jnp.zeros((rows, cols), a.dtype).at[: a.shape[0], : a.shape[1]].set(a)


def _pick_tk(d_in, block_k):
    """Largest multiple of 128 <= block_k that divides d_in (d_in is a 128-multiple)."""
    block_k = max(128, min(block_k, d_in))
    tk = block_k - (block_k % 128)
    while d_in % tk != 0:
        tk -= 128
    return tk


@functools.lru_cache(maxsize=1)
def _buffered1_supported():
    """Probe once whether single-buffered BlockSpecs (pl.Buffered(1)) lower cleanly.

    Used to halve the VMEM footprint of the VMEM-resident weights (key on v7x,
    which has only 64 MiB of VMEM per TensorCore). Falls back to the default
    double-buffering if unsupported on this jax/libtpu combination.
    """
    if not hasattr(pl, "Buffered"):
        return False
    try:
        def _probe_kernel(x_ref, o_ref):
            o_ref[...] = x_ref[...] + 1.0

        spec = pl.BlockSpec((8, 128), lambda i: (0, 0), pipeline_mode=pl.Buffered(1))
        fn = pl.pallas_call(
            _probe_kernel,
            out_shape=jax.ShapeDtypeStruct((8, 128), jnp.float32),
            grid=(1,),
            in_specs=[spec],
            out_specs=pl.BlockSpec((8, 128), lambda i: (0, 0)),
        )
        jax.block_until_ready(fn(jnp.zeros((8, 128), jnp.float32)))
        return True
    except Exception:
        return False


# --------------------------------------------------------------------------- #
# kernels
# --------------------------------------------------------------------------- #
def _encoder_kernel(x_ref, w1_ref, b1_ref, w2_ref, b2_ref, wh_ref, bh_ref, out_ref):
    """One batch tile: 3 MXU matmuls (mean/var heads fused), f32 accumulation."""
    cd = w1_ref.dtype                       # matmul operand dtype (bf16 fast path / f32 ref path)
    x = x_ref[...].astype(cd)               # cast in-kernel: no wrapper pad/cast HBM round trip

    h = jnp.dot(x, w1_ref[...], preferred_element_type=jnp.float32) + b1_ref[...]
    h = jnp.maximum(h, 0.0)
    h = jnp.dot(h.astype(cd), w2_ref[...], preferred_element_type=jnp.float32) + b2_ref[...]
    h = jnp.maximum(h, 0.0)

    out = jnp.dot(h.astype(cd), wh_ref[...], preferred_element_type=jnp.float32) + bh_ref[...]
    out_ref[...] = out.astype(out_ref.dtype)


def _encoder_kernel_ktiled(x_ref, w1_ref, b1_ref, w2_ref, b2_ref, wh_ref, bh_ref,
                           out_ref, acc_ref):
    """K-tiled first matmul (grid axis 1 over dim_image, 'arbitrary'); layers 2/3
    and the fused heads run on the last K step."""
    cd = w1_ref.dtype
    k = pl.program_id(1)

    @pl.when(k == 0)
    def _():
        acc_ref[...] = jnp.zeros_like(acc_ref)

    acc_ref[...] += jnp.dot(x_ref[...].astype(cd), w1_ref[...],
                            preferred_element_type=jnp.float32)

    @pl.when(k == pl.num_programs(1) - 1)
    def _():
        h = jnp.maximum(acc_ref[...] + b1_ref[...], 0.0)
        h = jnp.dot(h.astype(cd), w2_ref[...], preferred_element_type=jnp.float32) + b2_ref[...]
        h = jnp.maximum(h, 0.0)
        out = jnp.dot(h.astype(cd), wh_ref[...], preferred_element_type=jnp.float32) + bh_ref[...]
        out_ref[...] = out.astype(out_ref.dtype)


# --------------------------------------------------------------------------- #
# jitted implementation (all planning quantities are static / shape-derived)
# --------------------------------------------------------------------------- #
@functools.partial(
    jax.jit,
    static_argnames=("latent_dim", "tb", "tk", "single_buffer", "out_dtype"))
def _forward_impl(x, w1, b1, w2, b2, wh, bh, *, latent_dim, tb, tk, single_buffer, out_dtype):
    B, dim_image = x.shape
    d_in, d_hid = w1.shape
    d_out = wh.shape[1]
    cd = w1.dtype
    itemsize = jnp.dtype(cd).itemsize
    out_itemsize = jnp.dtype(out_dtype).itemsize
    b_pad = _round_up(B, tb)

    # x goes to the kernel in its own dtype; the bf16 cast happens in-kernel.
    # Padding only when the batch or feature dims are ragged.
    if b_pad == B and dim_image == d_in:
        xk = x
    else:
        xk = jnp.zeros((b_pad, d_in), x.dtype).at[:B, :dim_image].set(x)

    use_ktiled = tk < d_in

    def _resident(shape):
        kw = {"pipeline_mode": pl.Buffered(1)} if single_buffer else {}
        return pl.BlockSpec(shape, lambda *_: (0,) * len(shape), **kw)

    if not use_ktiled:
        grid = (b_pad // tb,)
        in_specs = [
            pl.BlockSpec((tb, d_in), lambda i: (i, 0)),        # x (batch-tiled, f32)
            _resident((d_in, d_hid)),                          # w1
            _resident((1, d_hid)),                             # b1
            _resident((d_hid, d_hid)),                         # w2
            _resident((1, d_hid)),                             # b2
            _resident((d_hid, d_out)),                         # w_heads = concat(wm | wv)
            _resident((1, d_out)),                             # b_heads
        ]
        out_specs = pl.BlockSpec((tb, d_out), lambda i: (i, 0))
        scratch = []
        kernel = _encoder_kernel
        dims = ("parallel",)
        dbl = 1 if single_buffer else 2
        resident_b = dbl * ((w1.size + w2.size + wh.size) * itemsize
                            + (b1.size + b2.size + bh.size) * 4)
        stream_b = 2 * tb * d_in * xk.dtype.itemsize + 2 * tb * d_out * out_itemsize
        compute_b = tb * (d_in + 2 * d_hid + d_out) * 4
    else:
        grid = (b_pad // tb, d_in // tk)
        in_specs = [
            pl.BlockSpec((tb, tk), lambda i, k: (i, k)),       # x (batch- and K-tiled)
            pl.BlockSpec((tk, d_hid), lambda i, k: (k, 0)),    # w1 (K-tiled, double-buffered)
            _resident((1, d_hid)),                             # b1
            _resident((d_hid, d_hid)),                         # w2
            _resident((1, d_hid)),                             # b2
            _resident((d_hid, d_out)),                         # w_heads
            _resident((1, d_out)),                             # b_heads
        ]
        out_specs = pl.BlockSpec((tb, d_out), lambda i, k: (i, 0))
        scratch = [pltpu.VMEM((tb, d_hid), jnp.float32)]       # f32 accumulator
        kernel = _encoder_kernel_ktiled
        dims = ("parallel", "arbitrary")
        dbl = 1 if single_buffer else 2
        resident_b = (dbl * ((w2.size + wh.size) * itemsize
                             + (b1.size + b2.size + bh.size) * 4)
                      + 2 * tk * d_hid * itemsize)
        stream_b = 2 * tb * tk * xk.dtype.itemsize + 2 * tb * d_out * out_itemsize
        compute_b = tb * (tk + 3 * d_hid + d_out) * 4

    need = resident_b + stream_b + compute_b
    vmem_limit = int(min(max(int(1.25 * need) + (4 << 20), 16 << 20), 112 << 20))

    flops = 2 * b_pad * (d_in * d_hid + d_hid * d_hid + d_hid * d_out)
    bytes_accessed = (xk.size * xk.dtype.itemsize
                      + (w1.size + w2.size + wh.size) * itemsize
                      + (b1.size + b2.size + bh.size) * 4
                      + b_pad * d_out * out_itemsize)

    out = pl.pallas_call(
        kernel,
        out_shape=jax.ShapeDtypeStruct((b_pad, d_out), out_dtype),
        grid=grid,
        in_specs=in_specs,
        out_specs=out_specs,
        scratch_shapes=scratch,
        compiler_params=pltpu.CompilerParams(
            dimension_semantics=dims,
            vmem_limit_bytes=vmem_limit),
        cost_estimate=pl.CostEstimate(
            flops=flops, transcendentals=0, bytes_accessed=bytes_accessed),
    )(xk, w1, b1, w2, b2, wh, bh)

    # mean/var split stays inside the jit so XLA fuses it with the consumer.
    mean = out[:B, :latent_dim]
    var = out[:B, latent_dim:2 * latent_dim]
    return mean, var


# --------------------------------------------------------------------------- #
# public API
# --------------------------------------------------------------------------- #
def pack_params(params, compute_dtype=jnp.bfloat16):
    """Pad / head-concatenate / cast the weights ONCE, outside the per-step forward.

    `params` holds pre-transposed (in, out) weights and (1, out) biases:
      w1/b1: dim_image->dim_hid, w2/b2: dim_hid->dim_hid, wm/bm & wv/bv: dim_hid->latent_dim.
    Returns a dict ready for encoder_forward (reuse it across calls).
    """
    dim_image, dim_hid = params["w1"].shape
    latent_dim = params["wm"].shape[1]
    d_in = _round_up(dim_image, 128)
    d_hid = _round_up(dim_hid, 128)
    d_out = _round_up(2 * latent_dim, 128)
    packed = dict(
        w1=_pad2(params["w1"], d_in, d_hid).astype(compute_dtype),
        b1=_pad2(params["b1"], 1, d_hid).astype(jnp.float32),
        w2=_pad2(params["w2"], d_hid, d_hid).astype(compute_dtype),
        b2=_pad2(params["b2"], 1, d_hid).astype(jnp.float32),
        wh=_pad2(jnp.concatenate([params["wm"], params["wv"]], axis=1),
                 d_hid, d_out).astype(compute_dtype),
        bh=_pad2(jnp.concatenate([params["bm"], params["bv"]], axis=1),
                 1, d_out).astype(jnp.float32),
    )
    return jax.block_until_ready(packed)


def encoder_forward(x, packed, latent_dim, *, block_b=256, block_k=None,
                    out_dtype=jnp.float32):
    """Encoder forward. x: (B, dim_image) f32; packed: pack_params() output.

    Returns (mean, var), each (B, latent_dim) in `out_dtype`.
    block_b: batch tile cap (raise to 512/1024 on v6e; ~256 on v7x; 128-256 on v5e).
    block_k: K-tile for the first matmul (auto: full dim_image unless it would blow VMEM).
    """
    w1, b1, w2, b2, wh, bh = (packed[k] for k in ("w1", "b1", "w2", "b2", "wh", "bh"))
    B, _ = x.shape
    d_in, d_hid = w1.shape
    itemsize = jnp.dtype(w1.dtype).itemsize

    # bf16 packs two rows per sublane -> 16-row granularity; f32 -> 8.
    gran = 16 if itemsize < 4 else 8
    tb = min(block_b, _round_up(B, gran))
    # Prefer >= 2 grid steps when the batch allows it (megacore sharding on v7x).
    if B >= 2 * gran and _round_up(B, tb) // tb < 2:
        tb = _round_up((B + 1) // 2, gran)

    # Auto K-tiling: keep the double-buffered f32 x tile + resident w1 well under
    # the most conservative scoped-VMEM default (v5e: 16 MiB).
    if block_k is None:
        block_k = d_in if (2 * tb * d_in * 4 + d_in * d_hid * itemsize) <= (12 << 20) else 1024
    tk = _pick_tk(d_in, block_k)

    return _forward_impl(x, w1, b1, w2, b2, wh, bh,
                         latent_dim=latent_dim, tb=tb, tk=tk,
                         single_buffer=_buffered1_supported(),
                         out_dtype=out_dtype)


# --------------------------------------------------------------------------- #
# init + reference
# --------------------------------------------------------------------------- #
def init_params(key, dim_image, dim_hid, latent_dim):
    """Deterministic init mimicking nn.Linear (uniform +-1/sqrt(fan_in)).
    Weights stored transposed: (in, out); biases (1, out)."""
    ks = jax.random.split(key, 8)

    def lin(kw, kb, fan_in, fan_out):
        bound = 1.0 / jnp.sqrt(fan_in)
        w = jax.random.uniform(kw, (fan_in, fan_out), jnp.float32, -bound, bound)
        b = jax.random.uniform(kb, (1, fan_out), jnp.float32, -bound, bound)
        return w, b

    w1, b1 = lin(ks[0], ks[1], dim_image, dim_hid)
    w2, b2 = lin(ks[2], ks[3], dim_hid, dim_hid)
    wm, bm = lin(ks[4], ks[5], dim_hid, latent_dim)
    wv, bv = lin(ks[6], ks[7], dim_hid, latent_dim)
    return dict(w1=w1, b1=b1, w2=w2, b2=b2, wm=wm, bm=bm, wv=wv, bv=bv)


def encoder_ref(x, p):
    """Pure-f32 JAX reference of the PyTorch forward."""
    h = jnp.maximum(x @ p["w1"] + p["b1"], 0.0)
    h = jnp.maximum(h @ p["w2"] + p["b2"], 0.0)
    return h @ p["wm"] + p["bm"], h @ p["wv"] + p["bv"]


# --------------------------------------------------------------------------- #
# demo / self-test
# --------------------------------------------------------------------------- #
if __name__ == "__main__":
    k1, k2, k3, k4, k5, k6 = jax.random.split(jax.random.PRNGKey(0), 6)

    # ---- case 1: small ragged dims (padding fallback path) ----
    B, dim_image, dim_hid, latent_dim = 8, 64, 32, 16
    params = init_params(k1, dim_image, dim_hid, latent_dim)
    x = jax.random.normal(k2, (B, dim_image), jnp.float32)
    mean_ref, var_ref = encoder_ref(x, params)

    packed_f32 = pack_params(params, compute_dtype=jnp.float32)   # validation path
    mean32, var32 = encoder_forward(x, packed_f32, latent_dim)
    jax.block_until_ready((mean32, var32))
    assert mean32.shape == (B, latent_dim) and var32.shape == (B, latent_dim)
    assert jnp.allclose(mean32, mean_ref, atol=1e-4, rtol=1e-4)
    assert jnp.allclose(var32, var_ref, atol=1e-4, rtol=1e-4)

    packed_bf16 = pack_params(params, compute_dtype=jnp.bfloat16)  # fast path (pack once, reuse)
    mean, var = encoder_forward(x, packed_bf16, latent_dim)
    mean, var = encoder_forward(x, packed_bf16, latent_dim)        # reuse packed weights
    jax.block_until_ready((mean, var))
    assert jnp.allclose(mean, mean_ref, atol=5e-2, rtol=5e-2)
    assert jnp.allclose(var, var_ref, atol=5e-2, rtol=5e-2)

    # ---- case 2: lane-aligned dims -> zero-copy x path, >= 2 batch tiles ----
    B2, di2, dh2, ld2 = 32, 128, 128, 16
    params2 = init_params(k3, di2, dh2, ld2)
    x2 = jax.random.normal(k4, (B2, di2), jnp.float32)
    mref2, vref2 = encoder_ref(x2, params2)
    m2, v2 = encoder_forward(x2, pack_params(params2, compute_dtype=jnp.float32), ld2)
    jax.block_until_ready((m2, v2))
    assert jnp.allclose(m2, mref2, atol=1e-4, rtol=1e-4)
    assert jnp.allclose(v2, vref2, atol=1e-4, rtol=1e-4)

    # ---- case 3: K-tiled first matmul (forced small block_k) ----
    B3, di3, dh3, ld3 = 16, 256, 32, 16
    params3 = init_params(k5, di3, dh3, ld3)
    x3 = jax.random.normal(k6, (B3, di3), jnp.float32)
    mref3, vref3 = encoder_ref(x3, params3)
    m3, v3 = encoder_forward(x3, pack_params(params3, compute_dtype=jnp.float32), ld3,
                             block_k=128)
    jax.block_until_ready((m3, v3))
    assert jnp.allclose(m3, mref3, atol=1e-4, rtol=1e-4)
    assert jnp.allclose(v3, vref3, atol=1e-4, rtol=1e-4)

    print("KERNEL_OK")
</pallas_src>

<mosaic_0001>
module attributes {stable_mosaic.version = 11 : i64} {
  func.func @_probe_kernel(%arg0: i32, %arg1: memref<8x128xf32, #tpu.memory_space<vmem>>, %arg2: memref<8x128xf32, #tpu.memory_space<vmem>>) attributes {dimension_semantics = [#tpu.dimension_semantics<arbitrary>], iteration_bounds = array<i64: 1>, scalar_prefetch = 0 : i64, scratch_operands = 0 : i64, tpu.core_type = #tpu.core_type<tc>, window_params = [{pipeline_mode = #tpu.pipeline_mode<synchronous>, transform_indices = @transform_0, window_bounds = array<i64: 8, 128>}, {pipeline_mode = #tpu.pipeline_mode<synchronous>, transform_indices = @transform_1, window_bounds = array<i64: 8, 128>}]} {
    %c0 = arith.constant 0 : index
    %c0_0 = arith.constant 0 : index
    %0 = vector.load %arg1[%c0, %c0_0] : memref<8x128xf32, #tpu.memory_space<vmem>>, vector<8x128xf32>
    %cst = arith.constant 1.000000e+00 : f32
    %1 = vector.broadcast %cst : f32 to vector<8x128xf32>
    %2 = arith.addf %0, %1 : vector<8x128xf32>
    %c0_1 = arith.constant 0 : index
    %c0_2 = arith.constant 0 : index
    %3 = vector.load %arg2[%c0_1, %c0_2] : memref<8x128xf32, #tpu.memory_space<vmem>>, vector<8x128xf32>
    tpu.vector_store %arg2[%c0_1, %c0_2], %2 {strides = array<i32>} : memref<8x128xf32, #tpu.memory_space<vmem>>, vector<8x128xf32>,
    return
  }
  func.func @transform_0(%arg0: i32) -> (i32, i32) {
    %c0_i32 = arith.constant 0 : i32
    %c0_i32_0 = arith.constant 0 : i32
    %c0_i32_1 = arith.constant 0 : i32
    return %c0_i32, %c0_i32_0 : i32, i32
  }
  func.func @transform_1(%arg0: i32) -> (i32, i32) {
    %c0_i32 = arith.constant 0 : i32
    %c0_i32_0 = arith.constant 0 : i32
    %c0_i32_1 = arith.constant 0 : i32
    return %c0_i32, %c0_i32_0 : i32, i32
  }
}

module attributes {stable_mosaic.version = 11 : i64} {
  func.func @_encoder_kernel(%arg0: i32, %arg1: memref<8x128xf32, #tpu.memory_space<vmem>>, %arg2: memref<128x128xf32, #tpu.memory_space<vmem>>, %arg3: memref<1x128xf32, #tpu.memory_space<vmem>>, %arg4: memref<128x128xf32, #tpu.memory_space<vmem>>, %arg5: memref<1x128xf32, #tpu.memory_space<vmem>>, %arg6: memref<128x128xf32, #tpu.memory_space<vmem>>, %arg7: memref<1x128xf32, #tpu.memory_space<vmem>>, %arg8: memref<8x128xf32, #tpu.memory_space<vmem>>) attributes {dimension_semantics = [#tpu.dimension_semantics<parallel>], iteration_bounds = array<i64: 1>, scalar_prefetch = 0 : i64, scratch_operands = 0 : i64, tpu.core_type = #tpu.core_type<tc>, window_params = [{transform_indices = @transform_0, window_bounds = array<i64: 8, 128>}, {pipeline_mode = #tpu.pipeline_mode<synchronous>, transform_indices = @transform_1, window_bounds = array<i64: 128, 128>}, {pipeline_mode = #tpu.pipeline_mode<synchronous>, transform_indices = @transform_2, window_bounds = array<i64: 1, 128>}, {pipeline_mode = #tpu.pipeline_mode<synchronous>, transform_indices = @transform_3, window_bounds = array<i64: 128, 128>}, {pipeline_mode = #tpu.pipeline_mode<synchronous>, transform_indices = @transform_4, window_bounds = array<i64: 1, 128>}, {pipeline_mode = #tpu.pipeline_mode<synchronous>, transform_indices = @transform_5, window_bounds = array<i64: 128, 128>}, {pipeline_mode = #tpu.pipeline_mode<synchronous>, transform_indices = @transform_6, window_bounds = array<i64: 1, 128>}, {transform_indices = @transform_7, window_bounds = array<i64: 8, 128>}]} {
    %c0 = arith.constant 0 : index
    %c0_0 = arith.constant 0 : index
    %0 = vector.load %arg1[%c0, %c0_0] : memref<8x128xf32, #tpu.memory_space<vmem>>, vector<8x128xf32>
    %c0_1 = arith.constant 0 : index
    %c0_2 = arith.constant 0 : index
    %1 = vector.load %arg2[%c0_1, %c0_2] : memref<128x128xf32, #tpu.memory_space<vmem>>, vector<128x128xf32>
    %cst = arith.constant dense<0.000000e+00> : vector<8x128xf32>
    %2 = tpu.matmul %0, %1, %cst {dimension_numbers = #tpu.dot_dimension_numbers<[1], [0], [0], [1], [0, 0, 1, 1], [], []>} : vector<8x128xf32>, vector<128x128xf32>, vector<8x128xf32> -> vector<8x128xf32>
    %c0_3 = arith.constant 0 : index
    %c0_4 = arith.constant 0 : index
    %3 = vector.load %arg3[%c0_3, %c0_4] : memref<1x128xf32, #tpu.memory_space<vmem>>, vector<1x128xf32>
    %4 = vector.broadcast %3 : vector<1x128xf32> to vector<8x128xf32>
    %5 = arith.addf %2, %4 : vector<8x128xf32>
    %cst_5 = arith.constant 0.000000e+00 : f32
    %6 = vector.broadcast %cst_5 : f32 to vector<8x128xf32>
    %7 = arith.maximumf %5, %6 : vector<8x128xf32>
    %c0_6 = arith.constant 0 : index
    %c0_7 = arith.constant 0 : index
    %8 = vector.load %arg4[%c0_6, %c0_7] : memref<128x128xf32, #tpu.memory_space<vmem>>, vector<128x128xf32>
    %cst_8 = arith.constant dense<0.000000e+00> : vector<8x128xf32>
    %9 = tpu.matmul %7, %8, %cst_8 {dimension_numbers = #tpu.dot_dimension_numbers<[1], [0], [0], [1], [0, 0, 1, 1], [], []>} : vector<8x128xf32>, vector<128x128xf32>, vector<8x128xf32> -> vector<8x128xf32>
    %c0_9 = arith.constant 0 : index
    %c0_10 = arith.constant 0 : index
    %10 = vector.load %arg5[%c0_9, %c0_10] : memref<1x128xf32, #tpu.memory_space<vmem>>, vector<1x128xf32>
    %11 = vector.broadcast %10 : vector<1x128xf32> to vector<8x128xf32>
    %12 = arith.addf %9, %11 : vector<8x128xf32>
    %cst_11 = arith.constant 0.000000e+00 : f32
    %13 = vector.broadcast %cst_11 : f32 to vector<8x128xf32>
    %14 = arith.maximumf %12, %13 : vector<8x128xf32>
    %c0_12 = arith.constant 0 : index
    %c0_13 = arith.constant 0 : index
    %15 = vector.load %arg6[%c0_12, %c0_13] : memref<128x128xf32, #tpu.memory_space<vmem>>, vector<128x128xf32>
    %cst_14 = arith.constant dense<0.000000e+00> : vector<8x128xf32>
    %16 = tpu.matmul %14, %15, %cst_14 {dimension_numbers = #tpu.dot_dimension_numbers<[1], [0], [0], [1], [0, 0, 1, 1], [], []>} : vector<8x128xf32>, vector<128x128xf32>, vector<8x128xf32> -> vector<8x128xf32>
    %c0_15 = arith.constant 0 : index
    %c0_16 = arith.constant 0 : index
    %17 = vector.load %arg7[%c0_15, %c0_16] : memref<1x128xf32, #tpu.memory_space<vmem>>, vector<1x128xf32>
    %18 = vector.broadcast %17 : vector<1x128xf32> to vector<8x128xf32>
    %19 = arith.addf %16, %18 : vector<8x128xf32>
    %c0_17 = arith.constant 0 : index
    %c0_18 = arith.constant 0 : index
    %20 = vector.load %arg8[%c0_17, %c0_18] : memref<8x128xf32, #tpu.memory_space<vmem>>, vector<8x128xf32>
    tpu.vector_store %arg8[%c0_17, %c0_18], %19 {strides = array<i32>} : memref<8x128xf32, #tpu.memory_space<vmem>>, vector<8x128xf32>,
    return
  }
  func.func @transform_0(%arg0: i32) -> (i32, i32) {
    %c0_i32 = arith.constant 0 : i32
    %c0_i32_0 = arith.constant 0 : i32
    return %arg0, %c0_i32 : i32, i32
  }
  func.func @transform_1(%arg0: i32) -> (i32, i32) {
    %c0_i32 = arith.constant 0 : i32
    %c0_i32_0 = arith.constant 0 : i32
    %c0_i32_1 = arith.constant 0 : i32
    return %c0_i32, %c0_i32_0 : i32, i32
  }
  func.func @transform_2(%arg0: i32) -> (i32, i32) {
    %c0_i32 = arith.constant 0 : i32
    %c0_i32_0 = arith.constant 0 : i32
    %c0_i32_1 = arith.constant 0 : i32
    return %c0_i32, %c0_i32_0 : i32, i32
  }
  func.func @transform_3(%arg0: i32) -> (i32, i32) {
    %c0_i32 = arith.constant 0 : i32
    %c0_i32_0 = arith.constant 0 : i32
    %c0_i32_1 = arith.constant 0 : i32
    return %c0_i32, %c0_i32_0 : i32, i32
  }
  func.func @transform_4(%arg0: i32) -> (i32, i32) {
    %c0_i32 = arith.constant 0 : i32
    %c0_i32_0 = arith.constant 0 : i32
    %c0_i32_1 = arith.constant 0 : i32
    return %c0_i32, %c0_i32_0 : i32, i32
  }
  func.func @transform_5(%arg0: i32) -> (i32, i32) {
    %c0_i32 = arith.constant 0 : i32
    %c0_i32_0 = arith.constant 0 : i32
    %c0_i32_1 = arith.constant 0 : i32
    return %c0_i32, %c0_i32_0 : i32, i32
  }
  func.func @transform_6(%arg0: i32) -> (i32, i32) {
    %c0_i32 = arith.constant 0 : i32
    %c0_i32_0 = arith.constant 0 : i32
    %c0_i32_1 = arith.constant 0 : i32
    return %c0_i32, %c0_i32_0 : i32, i32
  }
  func.func @transform_7(%arg0: i32) -> (i32, i32) {
    %c0_i32 = arith.constant 0 : i32
    %c0_i32_0 = arith.constant 0 : i32
    return %arg0, %c0_i32 : i32, i32
  }
}

</mosaic_0001>

<llo_original>
// kernel: tpu_custom_call.1
$region0: #{tpu_custom_call.1}
  #allocation0 [shape = 'u32[]', space=smem, size = 0x4, offset = 0x4, fixed_abs, tag = 'smem constant byte address 0x4 - core index']
  #allocation1 [shape = 'u32[144,128]{1,0:T(1,128)}', space=vmem, size = 0x12000, scoped, tag = 'internal scratch']
  %s0 = inlined_call_operand.hbm [shape: f32[8,128], index: 0, kind: input, shape index: {}]
  %s1 = inlined_call_operand.hbm [shape: f32[8,128], index: 1, kind: output, shape index: {}]
  %s2 = sld [smem:[#allocation0]]
  $region18: #{tpu_custom_call.1} parent=0
    _
  %s4 = ssub.s32 1, %s2
  %s5 = scalar_select 0, %s4, %s2
  $region1: #{tpu_custom_call.1} parent=0
    #allocation2 [shape = 'u8[4096]{0}', space=vmem, size = 0x1000, scoped, tag = 'input window, operand 0, single buffered']
    #allocation3 [shape = 's32[1]{0}', space=sflag, size = 0x4, scoped, tag = 'scoped memory for tpu_custom_call.1']
    #allocation4 [shape = 's32[1]{0}', space=sflag, size = 0x4, scoped, tag = 'scoped memory for tpu_custom_call.1']
    #allocation5 [shape = 'u8[4096]{0}', space=vmem, size = 0x1000, scoped, tag = 'output window, operand 0, single buffered']
    %6 = vsyncpa [#allocation3], 0
    %7 = vsyncpa [#allocation4], 0
    // Predicated region
    $region2: #{tpu_custom_call.1} parent=1 // pred_check
      _
    $region3: #{tpu_custom_call.1} parent=1 // pred_check_branch
      %9 = sbr.rel (0) target = $region5
    $region4: #{tpu_custom_call.1} parent=1 // pred_region
      %s11 = ssub.s32 128, 128
      %12 = vsyncadd [#allocation3], %s11
      %s14 = sshll.u32 [#allocation2], 4
      %s15 = int_to_ptr.vmem [resolvable:$true] %s14
      %17 = dma.hbm_to_vmem [thread:$0]  %s0, 128, %s15, [#allocation3]
    $region5: #{tpu_custom_call.1} parent=1 // pred_fallthru
      _
    // Predicated region
    $region6: #{tpu_custom_call.1} parent=1 // pred_check
      _
    $region7: #{tpu_custom_call.1} parent=1 // pred_check_branch
      %19 = sbr.rel (0) target = $region9
    $region8: #{tpu_custom_call.1} parent=1 // pred_region
      %20 = dma.done [#allocation3], 128
    $region9: #{tpu_custom_call.1} parent=1 // pred_fallthru
      _
    %v21 = vld [vmem:[#allocation2] sm:$0xff]
    %v22 = vadd.f32 %v21, 1.0
    %23 = vst [vmem:[#allocation5] sm:$0xff] %v22
    // Predicated region
    $region10: #{tpu_custom_call.1} parent=1 // pred_check
      _
    $region11: #{tpu_custom_call.1} parent=1 // pred_check_branch
      %25 = sbr.rel (0) target = $region13
    $region12: #{tpu_custom_call.1} parent=1 // pred_region
      %s27 = ssub.s32 128, 128
      %28 = vsyncadd [#allocation4], %s27
      %s30 = sshll.u32 [#allocation5], 4
      %s31 = int_to_ptr.vmem [resolvable:$true] %s30
      %33 = dma.vmem_to_hbm [thread:$0]  %s31, 128, %s1, [#allocation4]
    $region13: #{tpu_custom_call.1} parent=1 // pred_fallthru
      _
    // Predicated region
    $region14: #{tpu_custom_call.1} parent=1 // pred_check
      _
    $region15: #{tpu_custom_call.1} parent=1 // pred_check_branch
      %35 = sbr.rel (0) target = $region17
    $region16: #{tpu_custom_call.1} parent=1 // pred_region
      %36 = dma.done [#allocation4], 128
    $region17: #{tpu_custom_call.1} parent=1 // pred_fallthru
      _
    %37 = vsyncpa [#allocation3], 1
    %38 = vsyncpa [#allocation4], 1

// kernel: _forward_impl.1
$region0: #{_forward_impl.1}
  #allocation0 [shape = 'u32[]', space=smem, size = 0x4, offset = 0x4, fixed_abs, tag = 'smem constant byte address 0x4 - core index']
  #allocation1 [shape = 'u32[144,128]{1,0:T(1,128)}', space=vmem, size = 0x12000, scoped, tag = 'internal scratch']
  %s0 = inlined_call_operand.vmem [shape: f32[8,128], index: 0, kind: input, shape index: {}]
  %s1 = inlined_call_operand.hbm [shape: f32[128,128], index: 1, kind: input, shape index: {}]
  %s2 = inlined_call_operand.vmem [shape: f32[1,128], index: 2, kind: input, shape index: {}]
  %s3 = inlined_call_operand.hbm [shape: f32[128,128], index: 3, kind: input, shape index: {}]
  %s4 = inlined_call_operand.vmem [shape: f32[1,128], index: 4, kind: input, shape index: {}]
  %s5 = inlined_call_operand.hbm [shape: f32[128,128], index: 5, kind: input, shape index: {}]
  %s6 = inlined_call_operand.vmem [shape: f32[1,128], index: 6, kind: input, shape index: {}]
  %s7 = inlined_call_operand.vmem [shape: f32[8,128], index: 7, kind: output, shape index: {}]
  %s8 = sld [smem:[#allocation0]]
  $region50: #{_forward_impl.1} parent=0
    _
  %s10 = ssub.s32 1, %s8
  %s11 = scalar_select 0, %s10, %s8
  $region1: #{_forward_impl.1} parent=0
    #allocation2 [shape = 'u8[65536]{0}', space=vmem, size = 0x10000, scoped, tag = 'input window, operand 1, single buffered']
    #allocation3 [shape = 's32[1]{0}', space=sflag, size = 0x4, scoped, tag = 'scoped memory for _forward_impl.1']
    #allocation4 [shape = 'u8[65536]{0}', space=vmem, size = 0x10000, scoped, tag = 'input window, operand 3, single buffered']
    #allocation5 [shape = 's32[1]{0}', space=sflag, size = 0x4, scoped, tag = 'scoped memory for _forward_impl.1']
    #allocation6 [shape = 'u8[65536]{0}', space=vmem, size = 0x10000, scoped, tag = 'input window, operand 5, single buffered']
    %12 = vsyncpa [#allocation3], 0
    %13 = vsyncpa [#allocation5], 0
    // Predicated region
    $region2: #{_forward_impl.1} parent=1 // pred_check
      _
    $region3: #{_forward_impl.1} parent=1 // pred_check_branch
      %15 = sbr.rel (0) target = $region5
    $region4: #{_forward_impl.1} parent=1 // pred_region
      _
    $region5: #{_forward_impl.1} parent=1 // pred_fallthru
      _
    // Predicated region
    $region6: #{_forward_impl.1} parent=1 // pred_check
      _
    $region7: #{_forward_impl.1} parent=1 // pred_check_branch
      %17 = sbr.rel (0) target = $region9
    $region8: #{_forward_impl.1} parent=1 // pred_region
      %s19 = ssub.s32 2048, 2048
      %20 = vsyncadd [#allocation3], %s19
      %s21 = sshll.u32 [#allocation2], 4
      %s22 = int_to_ptr.vmem [resolvable:$true] %s21
      %27 = dma.hbm_to_vmem [thread:$0]  %s1, 2048, %s22, [#allocation3], 128, 128, 8
    $region9: #{_forward_impl.1} parent=1 // pred_fallthru
      _
    // Predicated region
    $region10: #{_forward_impl.1} parent=1 // pred_check
      _
    $region11: #{_forward_impl.1} parent=1 // pred_check_branch
      %29 = sbr.rel (0) target = $region13
    $region12: #{_forward_impl.1} parent=1 // pred_region
      _
    $region13: #{_forward_impl.1} parent=1 // pred_fallthru
      _
    // Predicated region
    $region14: #{_forward_impl.1} parent=1 // pred_check
      _
    $region15: #{_forward_impl.1} parent=1 // pred_check_branch
      %31 = sbr.rel (0) target = $region17
    $region16: #{_forward_impl.1} parent=1 // pred_region
      %s33 = ssub.s32 2048, 2048
      %34 = vsyncadd [#allocation5], %s33
      %s35 = sshll.u32 [#allocation4], 4
      %s36 = int_to_ptr.vmem [resolvable:$true] %s35
      %41 = dma.hbm_to_vmem [thread:$0]  %s3, 2048, %s36, [#allocation5], 128, 128, 8
    $region17: #{_forward_impl.1} parent=1 // pred_fallthru
      _
    // Predicated region
    $region18: #{_forward_impl.1} parent=1 // pred_check
      _
    $region19: #{_forward_impl.1} parent=1 // pred_check_branch
      %43 = sbr.rel (0) target = $region21
    $region20: #{_forward_impl.1} parent=1 // pred_region
      _
    $region21: #{_forward_impl.1} parent=1 // pred_fallthru
      _
    // Predicated region
    $region22: #{_forward_impl.1} parent=1 // pred_check
      _
    $region23: #{_forward_impl.1} parent=1 // pred_check_branch
      %45 = sbr.rel (0) target = $region25
    $region24: #{_forward_impl.1} parent=1 // pred_region
      %s47 = ssub.s32 2048, 2048
      %48 = vsyncadd [#allocation5], %s47
      %s49 = sshll.u32 [#allocation6], 4
      %s50 = int_to_ptr.vmem [resolvable:$true] %s49
      %55 = dma.hbm_to_vmem [thread:$0]  %s5, 2048, %s50, [#allocation5], 128, 128, 8
    $region25: #{_forward_impl.1} parent=1 // pred_fallthru
      _
    // Predicated region
    $region26: #{_forward_impl.1} parent=1 // pred_check
      _
    $region27: #{_forward_impl.1} parent=1 // pred_check_branch
      %57 = sbr.rel (0) target = $region29
    $region28: #{_forward_impl.1} parent=1 // pred_region
      _
    $region29: #{_forward_impl.1} parent=1 // pred_fallthru
      _
    // Predicated region
    $region30: #{_forward_impl.1} parent=1 // pred_check
      _
    $region31: #{_forward_impl.1} parent=1 // pred_check_branch
      %59 = sbr.rel (0) target = $region33
    $region32: #{_forward_impl.1} parent=1 // pred_region
      %60 = dma.done [#allocation3], 2048
    $region33: #{_forward_impl.1} parent=1 // pred_fallthru
      _
    // Predicated region
    $region34: #{_forward_impl.1} parent=1 // pred_check
      _
    $region35: #{_forward_impl.1} parent=1 // pred_check_branch
      %62 = sbr.rel (0) target = $region37
    $region36: #{_forward_impl.1} parent=1 // pred_region
      %63 = dma.done [#allocation5], 2048
    $region37: #{_forward_impl.1} parent=1 // pred_fallthru
      _
    // Predicated region
    $region38: #{_forward_impl.1} parent=1 // pred_check
      _
    $region39: #{_forward_impl.1} parent=1 // pred_check_branch
      %65 = sbr.rel (0) target = $region41
    $region40: #{_forward_impl.1} parent=1 // pred_region
      %66 = dma.done [#allocation5], 2048
    $region41: #{_forward_impl.1} parent=1 // pred_fallthru
      _
    %v67 = vld [vmem:[%s0] sm:$0xff]
    %v68 = vld [vmem:[#allocation2] sm:$0xff]
    %v69 = vld [vmem:[#allocation2 + $0x8] sm:$0xff]
    %v70 = vld [vmem:[#allocation2 + $0x10] sm:$0xff]
    %v71 = vld [vmem:[#allocation2 + $0x18] sm:$0xff]
    %v72 = vld [vmem:[#allocation2 + $0x20] sm:$0xff]
    %v73 = vld [vmem:[#allocation2 + $0x28] sm:$0xff]
    %v74 = vld [vmem:[#allocation2 + $0x30] sm:$0xff]
    %v75 = vld [vmem:[#allocation2 + $0x38] sm:$0xff]
    %v76 = vld [vmem:[#allocation2 + $0x40] sm:$0xff]
    %v77 = vld [vmem:[#allocation2 + $0x48] sm:$0xff]
    %v78 = vld [vmem:[#allocation2 + $0x50] sm:$0xff]
    %v79 = vld [vmem:[#allocation2 + $0x58] sm:$0xff]
    %v80 = vld [vmem:[#allocation2 + $0x60] sm:$0xff]
    %v81 = vld [vmem:[#allocation2 + $0x68] sm:$0xff]
    %v82 = vld [vmem:[#allocation2 + $0x70] sm:$0xff]
    %v83 = vld [vmem:[#allocation2 + $0x78] sm:$0xff]
    %v84 = vld [vmem:[%s2] sm:$0x1]
    %v86 = vlaneseq
    %v87 = vshrl.u32 %v86, 7
    %v88 = vsub.s32 0, %v87
    %v89 = vrot.slane %v84, %v88
    %91 = vmatprep.subr.mxu0 0.0
    %92 = vmatpush1.msra.mxu0 %v68
    %93 = vmatprep.subr.mxu0 0.0
    %94 = vmatpush1.msra.mxu0 %v69
    %95 = vmatprep.subr.mxu0 0.0
    %96 = vmatpush1.msra.mxu0 %v70
    %97 = vmatprep.subr.mxu0 0.0
    %98 = vmatpush1.msra.mxu0 %v71
    %99 = vmatprep.subr.mxu0 0.0
    %100 = vmatpush1.msra.mxu0 %v72
    %101 = vmatprep.subr.mxu0 0.0
    %102 = vmatpush1.msra.mxu0 %v73
    %103 = vmatprep.subr.mxu0 0.0
    %104 = vmatpush1.msra.mxu0 %v74
    %105 = vmatprep.subr.mxu0 0.0
    %106 = vmatpush1.msra.mxu0 %v75
    %107 = vmatprep.subr.mxu0 0.0
    %108 = vmatpush1.msra.mxu0 %v76
    %109 = vmatprep.subr.mxu0 0.0
    %110 = vmatpush1.msra.mxu0 %v77
    %111 = vmatprep.subr.mxu0 0.0
    %112 = vmatpush1.msra.mxu0 %v78
    %113 = vmatprep.subr.mxu0 0.0
    %114 = vmatpush1.msra.mxu0 %v79
    %115 = vmatprep.subr.mxu0 0.0
    %116 = vmatpush1.msra.mxu0 %v80
    %117 = vmatprep.subr.mxu0 0.0
    %118 = vmatpush1.msra.mxu0 %v81
    %119 = vmatprep.subr.mxu0 0.0
    %120 = vmatpush1.msra.mxu0 %v82
    %121 = vmatprep.subr.mxu0 0.0
    %122 = vmatpush1.msra.mxu0 %v83
    %123 = vmatprep.subr.mxu0 0.0
    %124 = vmatpush1.msra.mxu0 0.0
    %125 = vmatprep.subr.mxu0 0.0
    %126 = vmatpush1.msra.mxu0 0.0
    %127 = vmatprep.subr.mxu0 0.0
    %128 = vmatpush1.msra.mxu0 0.0
    %129 = vmatprep.subr.mxu0 0.0
    %130 = vmatpush1.msra.mxu0 0.0
    %131 = vmatprep.subr.mxu0 0.0
    %132 = vmatpush1.msra.mxu0 0.0
    %133 = vmatprep.subr.mxu0 0.0
    %134 = vmatpush1.msra.mxu0 0.0
    %135 = vmatprep.subr.mxu0 0.0
    %136 = vmatpush1.msra.mxu0 0.0
    %137 = vmatprep.subr.mxu0 0.0
    %138 = vmatpush1.msra.mxu0 0.0
    %139 = vmatprep.subr.mxu0 0.0
    %140 = vmatpush1.msra.mxu0 0.0
    %141 = vmatprep.subr.mxu0 0.0
    %142 = vmatpush1.msra.mxu0 0.0
    %143 = vmatprep.subr.mxu0 0.0
    %144 = vmatpush1.msra.mxu0 0.0
    %145 = vmatprep.subr.mxu0 0.0
    %146 = vmatpush1.msra.mxu0 0.0
    %147 = vmatprep.subr.mxu0 0.0
    %148 = vmatpush1.msra.mxu0 0.0
    %149 = vmatprep.subr.mxu0 0.0
    %150 = vmatpush1.msra.mxu0 0.0
    %151 = vmatprep.subr.mxu0 0.0
    %152 = vmatpush1.msra.mxu0 0.0
    %153 = vmatprep.subr.mxu0 0.0
    %154 = vmatpush1.msra.mxu0 0.0
    %155 = vmatprep.mubr.f32.mxu0 0.0
    %156 = vmatmul.mubr.f32.gmra.mrb[0].mxu0 %v67
    %v157 = vpop.f32.mrb[0].mxu0
    %v158 = vadd.f32 %v89, %v157
    %v159 = vpop.f32.mrb[0].mxu0
    %160 = vdwg.mxu0
    %v161 = vmax.f32 %v158, 0.0
    %v162 = vld [vmem:[#allocation4] sm:$0xff]
    %v163 = vld [vmem:[#allocation4 + $0x8] sm:$0xff]
    %v164 = vld [vmem:[#allocation4 + $0x10] sm:$0xff]
    %v165 = vld [vmem:[#allocation4 + $0x18] sm:$0xff]
    %v166 = vld [vmem:[#allocation4 + $0x20] sm:$0xff]
    %v167 = vld [vmem:[#allocation4 + $0x28] sm:$0xff]
    %v168 = vld [vmem:[#allocation4 + $0x30] sm:$0xff]
    %v169 = vld [vmem:[#allocation4 + $0x38] sm:$0xff]
    %v170 = vld [vmem:[#allocation4 + $0x40] sm:$0xff]
    %v171 = vld [vmem:[#allocation4 + $0x48] sm:$0xff]
    %v172 = vld [vmem:[#allocation4 + $0x50] sm:$0xff]
    %v173 = vld [vmem:[#allocation4 + $0x58] sm:$0xff]
    %v174 = vld [vmem:[#allocation4 + $0x60] sm:$0xff]
    %v175 = vld [vmem:[#allocation4 + $0x68] sm:$0xff]
    %v176 = vld [vmem:[#allocation4 + $0x70] sm:$0xff]
    %v177 = vld [vmem:[#allocation4 + $0x78] sm:$0xff]
    %v178 = vld [vmem:[%s4] sm:$0x1]
    %v180 = vlaneseq
    %v181 = vshrl.u32 %v180, 7
    %v182 = vsub.s32 0, %v181
    %v183 = vrot.slane %v178, %v182
    %185 = vmatprep.subr.mxu0 0.0
    %186 = vmatpush1.msra.mxu0 %v162
    %187 = vmatprep.subr.mxu0 0.0
    %188 = vmatpush1.msra.mxu0 %v163
    %189 = vmatprep.subr.mxu0 0.0
    %190 = vmatpush1.msra.mxu0 %v164
    %191 = vmatprep.subr.mxu0 0.0
    %192 = vmatpush1.msra.mxu0 %v165
    %193 = vmatprep.subr.mxu0 0.0
    %194 = vmatpush1.msra.mxu0 %v166
    %195 = vmatprep.subr.mxu0 0.0
    %196 = vmatpush1.msra.mxu0 %v167
    %197 = vmatprep.subr.mxu0 0.0
    %198 = vmatpush1.msra.mxu0 %v168
    %199 = vmatprep.subr.mxu0 0.0
    %200 = vmatpush1.msra.mxu0 %v169
    %201 = vmatprep.subr.mxu0 0.0
    %202 = vmatpush1.msra.mxu0 %v170
    %203 = vmatprep.subr.mxu0 0.0
    %204 = vmatpush1.msra.mxu0 %v171
    %205 = vmatprep.subr.mxu0 0.0
    %206 = vmatpush1.msra.mxu0 %v172
    %207 = vmatprep.subr.mxu0 0.0
    %208 = vmatpush1.msra.mxu0 %v173
    %209 = vmatprep.subr.mxu0 0.0
    %210 = vmatpush1.msra.mxu0 %v174
    %211 = vmatprep.subr.mxu0 0.0
    %212 = vmatpush1.msra.mxu0 %v175
    %213 = vmatprep.subr.mxu0 0.0
    %214 = vmatpush1.msra.mxu0 %v176
    %215 = vmatprep.subr.mxu0 0.0
    %216 = vmatpush1.msra.mxu0 %v177
    %217 = vmatprep.subr.mxu0 0.0
    %218 = vmatpush1.msra.mxu0 0.0
    %219 = vmatprep.subr.mxu0 0.0
    %220 = vmatpush1.msra.mxu0 0.0
    %221 = vmatprep.subr.mxu0 0.0
    %222 = vmatpush1.msra.mxu0 0.0
    %223 = vmatprep.subr.mxu0 0.0
    %224 = vmatpush1.msra.mxu0 0.0
    %225 = vmatprep.subr.mxu0 0.0
    %226 = vmatpush1.msra.mxu0 0.0
    %227 = vmatprep.subr.mxu0 0.0
    %228 = vmatpush1.msra.mxu0 0.0
    %229 = vmatprep.subr.mxu0 0.0
    %230 = vmatpush1.msra.mxu0 0.0
    %231 = vmatprep.subr.mxu0 0.0
    %232 = vmatpush1.msra.mxu0 0.0
    %233 = vmatprep.subr.mxu0 0.0
    %234 = vmatpush1.msra.mxu0 0.0
    %235 = vmatprep.subr.mxu0 0.0
    %236 = vmatpush1.msra.mxu0 0.0
    %237 = vmatprep.subr.mxu0 0.0
    %238 = vmatpush1.msra.mxu0 0.0
    %239 = vmatprep.subr.mxu0 0.0
    %240 = vmatpush1.msra.mxu0 0.0
    %241 = vmatprep.subr.mxu0 0.0
    %242 = vmatpush1.msra.mxu0 0.0
    %243 = vmatprep.subr.mxu0 0.0
    %244 = vmatpush1.msra.mxu0 0.0
    %245 = vmatprep.subr.mxu0 0.0
    %246 = vmatpush1.msra.mxu0 0.0
    %247 = vmatprep.subr.mxu0 0.0
    %248 = vmatpush1.msra.mxu0 0.0
    %249 = vmatprep.mubr.f32.mxu0 0.0
    %250 = vmatmul.mubr.f32.gmra.mrb[0].mxu0 %v161
    %v251 = vpop.f32.mrb[0].mxu0
    %v252 = vadd.f32 %v183, %v251
    %v253 = vpop.f32.mrb[0].mxu0
    %254 = vdwg.mxu0
    %v255 = vmax.f32 %v252, 0.0
    %v256 = vld [vmem:[#allocation6] sm:$0xff]
    %v257 = vld [vmem:[#allocation6 + $0x8] sm:$0xff]
    %v258 = vld [vmem:[#allocation6 + $0x10] sm:$0xff]
    %v259 = vld [vmem:[#allocation6 + $0x18] sm:$0xff]
    %v260 = vld [vmem:[#allocation6 + $0x20] sm:$0xff]
    %v261 = vld [vmem:[#allocation6 + $0x28] sm:$0xff]
    %v262 = vld [vmem:[#allocation6 + $0x30] sm:$0xff]
    %v263 = vld [vmem:[#allocation6 + $0x38] sm:$0xff]
    %v264 = vld [vmem:[#allocation6 + $0x40] sm:$0xff]
    %v265 = vld [vmem:[#allocation6 + $0x48] sm:$0xff]
    %v266 = vld [vmem:[#allocation6 + $0x50] sm:$0xff]
    %v267 = vld [vmem:[#allocation6 + $0x58] sm:$0xff]
    %v268 = vld [vmem:[#allocation6 + $0x60] sm:$0xff]
    %v269 = vld [vmem:[#allocation6 + $0x68] sm:$0xff]
    %v270 = vld [vmem:[#allocation6 + $0x70] sm:$0xff]
    %v271 = vld [vmem:[#allocation6 + $0x78] sm:$0xff]
    %v272 = vld [vmem:[%s6] sm:$0x1]
    %v274 = vlaneseq
    %v275 = vshrl.u32 %v274, 7
    %v276 = vsub.s32 0, %v275
    %v277 = vrot.slane %v272, %v276
    %279 = vmatprep.subr.mxu0 0.0
    %280 = vmatpush1.msra.mxu0 %v256
    %281 = vmatprep.subr.mxu0 0.0
    %282 = vmatpush1.msra.mxu0 %v257
    %283 = vmatprep.subr.mxu0 0.0
    %284 = vmatpush1.msra.mxu0 %v258
    %285 = vmatprep.subr.mxu0 0.0
    %286 = vmatpush1.msra.mxu0 %v259
    %287 = vmatprep.subr.mxu0 0.0
    %288 = vmatpush1.msra.mxu0 %v260
    %289 = vmatprep.subr.mxu0 0.0
    %290 = vmatpush1.msra.mxu0 %v261
    %291 = vmatprep.subr.mxu0 0.0
    %292 = vmatpush1.msra.mxu0 %v262
    %293 = vmatprep.subr.mxu0 0.0
    %294 = vmatpush1.msra.mxu0 %v263
    %295 = vmatprep.subr.mxu0 0.0
    %296 = vmatpush1.msra.mxu0 %v264
    %297 = vmatprep.subr.mxu0 0.0
    %298 = vmatpush1.msra.mxu0 %v265
    %299 = vmatprep.subr.mxu0 0.0
    %300 = vmatpush1.msra.mxu0 %v266
    %301 = vmatprep.subr.mxu0 0.0
    %302 = vmatpush1.msra.mxu0 %v267
    %303 = vmatprep.subr.mxu0 0.0
    %304 = vmatpush1.msra.mxu0 %v268
    %305 = vmatprep.subr.mxu0 0.0
    %306 = vmatpush1.msra.mxu0 %v269
    %307 = vmatprep.subr.mxu0 0.0
    %308 = vmatpush1.msra.mxu0 %v270
    %309 = vmatprep.subr.mxu0 0.0
    %310 = vmatpush1.msra.mxu0 %v271
    %311 = vmatprep.subr.mxu0 0.0
    %312 = vmatpush1.msra.mxu0 0.0
    %313 = vmatprep.subr.mxu0 0.0
    %314 = vmatpush1.msra.mxu0 0.0
    %315 = vmatprep.subr.mxu0 0.0
    %316 = vmatpush1.msra.mxu0 0.0
    %317 = vmatprep.subr.mxu0 0.0
    %318 = vmatpush1.msra.mxu0 0.0
    %319 = vmatprep.subr.mxu0 0.0
    %320 = vmatpush1.msra.mxu0 0.0
    %321 = vmatprep.subr.mxu0 0.0
    %322 = vmatpush1.msra.mxu0 0.0
    %323 = vmatprep.subr.mxu0 0.0
    %324 = vmatpush1.msra.mxu0 0.0
    %325 = vmatprep.subr.mxu0 0.0
    %326 = vmatpush1.msra.mxu0 0.0
    %327 = vmatprep.subr.mxu0 0.0
    %328 = vmatpush1.msra.mxu0 0.0
    %329 = vmatprep.subr.mxu0 0.0
    %330 = vmatpush1.msra.mxu0 0.0
    %331 = vmatprep.subr.mxu0 0.0
    %332 = vmatpush1.msra.mxu0 0.0
    %333 = vmatprep.subr.mxu0 0.0
    %334 = vmatpush1.msra.mxu0 0.0
    %335 = vmatprep.subr.mxu0 0.0
    %336 = vmatpush1.msra.mxu0 0.0
    %337 = vmatprep.subr.mxu0 0.0
    %338 = vmatpush1.msra.mxu0 0.0
    %339 = vmatprep.subr.mxu0 0.0
    %340 = vmatpush1.msra.mxu0 0.0
    %341 = vmatprep.subr.mxu0 0.0
    %342 = vmatpush1.msra.mxu0 0.0
    %343 = vmatprep.mubr.f32.mxu0 0.0
    %344 = vmatmul.mubr.f32.gmra.mrb[0].mxu0 %v255
    %v345 = vpop.f32.mrb[0].mxu0
    %v346 = vadd.f32 %v277, %v345
    %v347 = vpop.f32.mrb[0].mxu0
    %348 = vdwg.mxu0
    %349 = vst [vmem:[%s7] sm:$0xff] %v346
    // Predicated region
    $region42: #{_forward_impl.1} parent=1 // pred_check
      _
    $region43: #{_forward_impl.1} parent=1 // pred_check_branch
      %351 = sbr.rel (0) target = $region45
    $region44: #{_forward_impl.1} parent=1 // pred_region
      _
    $region45: #{_forward_impl.1} parent=1 // pred_fallthru
      _
    // Predicated region
    $region46: #{_forward_impl.1} parent=1 // pred_check
      _
    $region47: #{_forward_impl.1} parent=1 // pred_check_branch
      %353 = sbr.rel (0) target = $region49
    $region48: #{_forward_impl.1} parent=1 // pred_region
      _
    $region49: #{_forward_impl.1} parent=1 // pred_fallthru
      _
    %354 = vsyncpa [#allocation3], 1
    %355 = vsyncpa [#allocation5], 1

</llo_original>
